<compile_context>
chip_gen: v6e
topology: v6e:2x2x1
jax: 0.10.0
libtpu: 0.0.40
codegen_flags: <defaults>
</compile_context>

<pallas_src>
import functools

import jax
import jax.numpy as jnp
from jax.experimental import pallas as pl
from jax.experimental.pallas import tpu as pltpu

_LANE = 128      # vreg lane width
_SUBLANE = 8     # vreg sublane count (f32)


def _round_up(x, m):
    return (x + m - 1) // m * m


def _linear_kernel(h_ref, w_ref, b_ref, o_ref):
    # h_ref: [tb, H]        activation tile (streamed over the batch grid)
    # w_ref: [H, O_pad]     lane-padded weight, VMEM-resident across tiles
    # b_ref: [1, out_dim]   bias, VMEM-resident, f32
    # o_ref: [tb, out_dim]  UNPADDED output tile (last dim == full array extent)
    out_dim = o_ref.shape[-1]
    h = h_ref[...]
    if h.dtype != w_ref.dtype:
        h = h.astype(w_ref.dtype)        # in-kernel cast; hides under the DMA
    acc = jnp.dot(h, w_ref[...], preferred_element_type=jnp.float32)
    # Slice off the MXU lane padding in-register; the resulting 16-lane masked
    # store is in-core and hidden under the dominant HBM traffic.
    o_ref[...] = (acc[:, :out_dim] + b_ref[...]).astype(o_ref.dtype)


def prepare_dynamics_params(weight, bias, *, param_dtype=None):
    """One-time parameter prep (do at load time, NOT per forward call).

    weight: [out_dim, hidden_dim] (PyTorch nn.Linear convention)
    bias:   [out_dim]
    param_dtype: optional storage/MXU dtype for the weight (e.g. jnp.bfloat16);
                 the bias add and accumulation stay f32.

    Returns (w_t_pad [H, O_pad], b [1, out_dim], out_dim). The weight's O axis
    is padded to a multiple of 128 so the MXU operates on full lanes; the
    padding never reaches HBM on the output side.
    """
    out_dim, hidden = weight.shape
    o_pad = _round_up(out_dim, _LANE)
    if param_dtype is None:
        param_dtype = weight.dtype
    w_t = jnp.transpose(weight).astype(param_dtype)                 # hoisted once
    w_t_pad = jnp.zeros((hidden, o_pad), param_dtype).at[:, :out_dim].set(w_t)
    b = bias.reshape(1, out_dim).astype(jnp.float32)                # f32 bias add
    return w_t_pad, b, out_dim


@functools.partial(jax.jit, static_argnums=(3,),
                   static_argnames=("tile_b", "out_dtype"))
def dynamics_net_forward(h, w_t_pad, b, out_dim, *, tile_b=1024, out_dtype=None):
    """Equivalent to PyTorch nn.Linear forward: h @ weight.T + bias.

    h:        [B, hidden_dim]
    w_t_pad:  [hidden_dim, O_pad]  (from prepare_dynamics_params)
    b:        [1, out_dim]         (from prepare_dynamics_params)
    returns   [B, out_dim] in out_dtype (defaults to h.dtype; pass jnp.bfloat16
              to halve the dominant output write stream if consumers allow it).
    """
    B, H = h.shape
    o_pad = w_t_pad.shape[1]
    out_dtype = jnp.dtype(h.dtype if out_dtype is None else out_dtype)

    # Batch tile: multiple of 8 sublanes, at most tile_b, and capped so the
    # grid has >=4 steps when B is large enough (v7x has 2 TCs + pipelining).
    tb = min(_round_up(tile_b, _SUBLANE),
             max(_SUBLANE, _round_up(pl.cdiv(B, 4), _SUBLANE)))
    grid = (pl.cdiv(B, tb),)   # ragged last block handled by Pallas (no pad copy)

    h_bytes = jnp.dtype(h.dtype).itemsize
    o_bytes = out_dtype.itemsize
    w_bytes = w_t_pad.size * jnp.dtype(w_t_pad.dtype).itemsize
    b_bytes = b.size * jnp.dtype(b.dtype).itemsize

    cost = pl.CostEstimate(
        flops=2 * B * H * out_dim,
        transcendentals=0,
        bytes_accessed=B * H * h_bytes + w_bytes + b_bytes + B * out_dim * o_bytes,
    )

    # Double-buffered activation + output streams plus resident weight/bias.
    vmem_needed = 2 * tb * (H * h_bytes + out_dim * o_bytes) + w_bytes + b_bytes
    vmem_limit = int(min(64 * 1024 * 1024, max(16 * 1024 * 1024, 2 * vmem_needed)))

    return pl.pallas_call(
        _linear_kernel,
        out_shape=jax.ShapeDtypeStruct((B, out_dim), out_dtype),
        grid=grid,
        in_specs=[
            pl.BlockSpec((tb, H), lambda i: (i, 0)),        # activation stream
            pl.BlockSpec((H, o_pad), lambda i: (0, 0)),     # weight: VMEM-resident
            pl.BlockSpec((1, out_dim), lambda i: (0, 0)),   # bias:   VMEM-resident
        ],
        out_specs=pl.BlockSpec((tb, out_dim), lambda i: (i, 0)),   # unpadded store
        compiler_params=pltpu.CompilerParams(
            dimension_semantics=("parallel",),   # inert on 1-TC chips, shards on v7x
            vmem_limit_bytes=vmem_limit,
        ),
        cost_estimate=cost,
    )(h, w_t_pad, b)


if __name__ == "__main__":
    # Small shapes consistent with the module: batch=8, hidden_dim=32, out_dim=16
    B, HIDDEN, OUT = 8, 32, 16

    key = jax.random.PRNGKey(0)
    k_h, k_w, k_b = jax.random.split(key, 3)

    h = jax.random.normal(k_h, (B, HIDDEN), dtype=jnp.float32)
    # Deterministic param init mimicking nn.Linear's uniform(-1/sqrt(in), 1/sqrt(in))
    bound = 1.0 / (HIDDEN ** 0.5)
    weight = jax.random.uniform(k_w, (OUT, HIDDEN), jnp.float32, -bound, bound)
    bias = jax.random.uniform(k_b, (OUT,), jnp.float32, -bound, bound)

    # One-time parameter prep (transpose + lane padding + optional dtype cast).
    w_t_pad, b, out_dim = prepare_dynamics_params(weight, bias)

    out = dynamics_net_forward(h, w_t_pad, b, out_dim)
    out = jax.block_until_ready(out)

    # Reference check against plain JAX (same semantics as torch.nn.Linear)
    ref = h @ weight.T + bias
    assert out.shape == (B, OUT)
    assert jnp.allclose(out, ref, atol=1e-5, rtol=1e-5)

    print("KERNEL_OK")
</pallas_src>

<mosaic_0001>
module attributes {stable_mosaic.version = 11 : i64} {
  func.func @_linear_kernel(%arg0: i32, %arg1: memref<8x32xf32, #tpu.memory_space<vmem>>, %arg2: memref<32x128xf32, #tpu.memory_space<vmem>>, %arg3: memref<1x16xf32, #tpu.memory_space<vmem>>, %arg4: memref<8x16xf32, #tpu.memory_space<vmem>>) attributes {dimension_semantics = [#tpu.dimension_semantics<parallel>], iteration_bounds = array<i64: 1>, scalar_prefetch = 0 : i64, scratch_operands = 0 : i64, tpu.core_type = #tpu.core_type<tc>, window_params = [{transform_indices = @transform_0, window_bounds = array<i64: 8, 32>}, {pipeline_mode = #tpu.pipeline_mode<synchronous>, transform_indices = @transform_1, window_bounds = array<i64: 32, 128>}, {pipeline_mode = #tpu.pipeline_mode<synchronous>, transform_indices = @transform_2, window_bounds = array<i64: 1, 16>}, {transform_indices = @transform_3, window_bounds = array<i64: 8, 16>}]} {
    %c0 = arith.constant 0 : index
    %c0_0 = arith.constant 0 : index
    %0 = vector.load %arg1[%c0, %c0_0] : memref<8x32xf32, #tpu.memory_space<vmem>>, vector<8x32xf32>
    %c0_1 = arith.constant 0 : index
    %c0_2 = arith.constant 0 : index
    %1 = vector.load %arg2[%c0_1, %c0_2] : memref<32x128xf32, #tpu.memory_space<vmem>>, vector<32x128xf32>
    %cst = arith.constant dense<0.000000e+00> : vector<8x128xf32>
    %2 = tpu.matmul %0, %1, %cst {dimension_numbers = #tpu.dot_dimension_numbers<[1], [0], [0], [1], [0, 0, 1, 1], [], []>} : vector<8x32xf32>, vector<32x128xf32>, vector<8x128xf32> -> vector<8x128xf32>
    %3 = vector.extract_strided_slice %2 {offsets = [0, 0], sizes = [8, 16], strides = [1, 1]} : vector<8x128xf32> to vector<8x16xf32>
    %c0_3 = arith.constant 0 : index
    %c0_4 = arith.constant 0 : index
    %4 = vector.load %arg3[%c0_3, %c0_4] : memref<1x16xf32, #tpu.memory_space<vmem>>, vector<1x16xf32>
    %5 = vector.broadcast %4 : vector<1x16xf32> to vector<8x16xf32>
    %6 = arith.addf %3, %5 : vector<8x16xf32>
    %c0_5 = arith.constant 0 : index
    %c0_6 = arith.constant 0 : index
    %7 = vector.load %arg4[%c0_5, %c0_6] : memref<8x16xf32, #tpu.memory_space<vmem>>, vector<8x16xf32>
    tpu.vector_store %arg4[%c0_5, %c0_6], %6 {strides = array<i32>} : memref<8x16xf32, #tpu.memory_space<vmem>>, vector<8x16xf32>,
    return
  }
  func.func @transform_0(%arg0: i32) -> (i32, i32) {
    %c0_i32 = arith.constant 0 : i32
    %c0_i32_0 = arith.constant 0 : i32
    return %arg0, %c0_i32 : i32, i32
  }
  func.func @transform_1(%arg0: i32) -> (i32, i32) {
    %c0_i32 = arith.constant 0 : i32
    %c0_i32_0 = arith.constant 0 : i32
    %c0_i32_1 = arith.constant 0 : i32
    return %c0_i32, %c0_i32_0 : i32, i32
  }
  func.func @transform_2(%arg0: i32) -> (i32, i32) {
    %c0_i32 = arith.constant 0 : i32
    %c0_i32_0 = arith.constant 0 : i32
    %c0_i32_1 = arith.constant 0 : i32
    return %c0_i32, %c0_i32_0 : i32, i32
  }
  func.func @transform_3(%arg0: i32) -> (i32, i32) {
    %c0_i32 = arith.constant 0 : i32
    %c0_i32_0 = arith.constant 0 : i32
    return %arg0, %c0_i32 : i32, i32
  }
}

</mosaic_0001>

<llo_original>
// kernel: dynamics_net_forward.1
$region0: #{dynamics_net_forward.1}
  #allocation0 [shape = 'u32[]', space=smem, size = 0x4, offset = 0x4, fixed_abs, tag = 'smem constant byte address 0x4 - core index']
  #allocation1 [shape = 'u32[144,128]{1,0:T(1,128)}', space=vmem, size = 0x12000, scoped, tag = 'internal scratch']
  %s0 = inlined_call_operand.hbm [shape: f32[8,32], index: 0, kind: input, shape index: {}]
  %s1 = inlined_call_operand.hbm [shape: f32[32,128], index: 1, kind: input, shape index: {}]
  %s2 = inlined_call_operand.vmem [shape: f32[1,16], index: 2, kind: input, shape index: {}]
  %s3 = inlined_call_operand.hbm [shape: f32[8,16], index: 3, kind: output, shape index: {}]
  %s4 = sld [smem:[#allocation0]]
  $region30: #{dynamics_net_forward.1} parent=0
    _
  %s6 = ssub.s32 1, %s4
  %s7 = scalar_select 0, %s6, %s4
  $region1: #{dynamics_net_forward.1} parent=0
    #allocation2 [shape = 'u8[4096]{0}', space=vmem, size = 0x1000, scoped, tag = 'input window, operand 0, single buffered']
    #allocation3 [shape = 's32[1]{0}', space=sflag, size = 0x4, scoped, tag = 'scoped memory for dynamics_net_forward.1']
    #allocation4 [shape = 's32[1]{0}', space=sflag, size = 0x4, scoped, tag = 'scoped memory for dynamics_net_forward.1']
    #allocation5 [shape = 'u8[16384]{0}', space=vmem, size = 0x4000, scoped, tag = 'input window, operand 1, single buffered']
    #allocation6 [shape = 's32[1]{0}', space=sflag, size = 0x4, scoped, tag = 'scoped memory for dynamics_net_forward.1']
    #allocation7 [shape = 'u8[4096]{0}', space=vmem, size = 0x1000, scoped, tag = 'output window, operand 0, single buffered']
    %8 = vsyncpa [#allocation3], 0
    %9 = vsyncpa [#allocation6], 0
    %10 = vsyncpa [#allocation4], 0
    // Predicated region
    $region2: #{dynamics_net_forward.1} parent=1 // pred_check
      _
    $region3: #{dynamics_net_forward.1} parent=1 // pred_check_branch
      %12 = sbr.rel (0) target = $region5
    $region4: #{dynamics_net_forward.1} parent=1 // pred_region
      %s14 = ssub.s32 128, 128
      %15 = vsyncadd [#allocation3], %s14
      %s17 = sshll.u32 [#allocation2], 4
      %s18 = int_to_ptr.vmem [resolvable:$true] %s17
      %20 = dma.hbm_to_vmem [thread:$0]  %s0, 128, %s18, [#allocation3]
    $region5: #{dynamics_net_forward.1} parent=1 // pred_fallthru
      _
    // Predicated region
    $region6: #{dynamics_net_forward.1} parent=1 // pred_check
      _
    $region7: #{dynamics_net_forward.1} parent=1 // pred_check_branch
      %22 = sbr.rel (0) target = $region9
    $region8: #{dynamics_net_forward.1} parent=1 // pred_region
      %s24 = ssub.s32 512, 512
      %25 = vsyncadd [#allocation6], %s24
      %s26 = sshll.u32 [#allocation5], 4
      %s27 = int_to_ptr.vmem [resolvable:$true] %s26
      %32 = dma.hbm_to_vmem [thread:$0]  %s1, 512, %s27, [#allocation6], 128, 128, 8
    $region9: #{dynamics_net_forward.1} parent=1 // pred_fallthru
      _
    // Predicated region
    $region10: #{dynamics_net_forward.1} parent=1 // pred_check
      _
    $region11: #{dynamics_net_forward.1} parent=1 // pred_check_branch
      %34 = sbr.rel (0) target = $region13
    $region12: #{dynamics_net_forward.1} parent=1 // pred_region
      _
    $region13: #{dynamics_net_forward.1} parent=1 // pred_fallthru
      _
    // Predicated region
    $region14: #{dynamics_net_forward.1} parent=1 // pred_check
      _
    $region15: #{dynamics_net_forward.1} parent=1 // pred_check_branch
      %36 = sbr.rel (0) target = $region17
    $region16: #{dynamics_net_forward.1} parent=1 // pred_region
      %37 = dma.done [#allocation3], 128
    $region17: #{dynamics_net_forward.1} parent=1 // pred_fallthru
      _
    // Predicated region
    $region18: #{dynamics_net_forward.1} parent=1 // pred_check
      _
    $region19: #{dynamics_net_forward.1} parent=1 // pred_check_branch
      %39 = sbr.rel (0) target = $region21
    $region20: #{dynamics_net_forward.1} parent=1 // pred_region
      %40 = dma.done [#allocation6], 512
    $region21: #{dynamics_net_forward.1} parent=1 // pred_fallthru
      _
    %v41 = vld [vmem:[#allocation2] sm:$0xff]
    %v42 = vld [vmem:[#allocation5] sm:$0xff]
    %v43 = vld [vmem:[#allocation5 + $0x8] sm:$0xff]
    %v44 = vld [vmem:[#allocation5 + $0x10] sm:$0xff]
    %v45 = vld [vmem:[#allocation5 + $0x18] sm:$0xff]
    %vm46 = vcmask 261120
    %v48 = vsel %vm46, %v41, 0
    %50 = vmatprep.subr.mxu0 0.0
    %51 = vmatpush1.msra.mxu0 0.0
    %52 = vmatprep.subr.mxu0 0.0
    %53 = vmatpush1.msra.mxu0 0.0
    %54 = vmatprep.subr.mxu0 0.0
    %55 = vmatpush1.msra.mxu0 0.0
    %56 = vmatprep.subr.mxu0 0.0
    %57 = vmatpush1.msra.mxu0 0.0
    %58 = vmatprep.subr.mxu0 0.0
    %59 = vmatpush1.msra.mxu0 0.0
    %60 = vmatprep.subr.mxu0 0.0
    %61 = vmatpush1.msra.mxu0 0.0
    %62 = vmatprep.subr.mxu0 0.0
    %63 = vmatpush1.msra.mxu0 0.0
    %64 = vmatprep.subr.mxu0 0.0
    %65 = vmatpush1.msra.mxu0 0.0
    %66 = vmatprep.subr.mxu0 0.0
    %67 = vmatpush1.msra.mxu0 0.0
    %68 = vmatprep.subr.mxu0 0.0
    %69 = vmatpush1.msra.mxu0 0.0
    %70 = vmatprep.subr.mxu0 0.0
    %71 = vmatpush1.msra.mxu0 0.0
    %72 = vmatprep.subr.mxu0 0.0
    %73 = vmatpush1.msra.mxu0 0.0
    %74 = vmatprep.subr.mxu0 0.0
    %75 = vmatpush1.msra.mxu0 %v45
    %76 = vmatprep.subr.mxu0 0.0
    %77 = vmatpush1.msra.mxu0 %v44
    %78 = vmatprep.subr.mxu0 0.0
    %79 = vmatpush1.msra.mxu0 %v43
    %80 = vmatprep.subr.mxu0 0.0
    %81 = vmatpush1.msra.mxu0 %v42
    %82 = vmatprep.subr.mxu0 0.0
    %83 = vmatpush2.msra.mxu0 0.0
    %84 = vmatprep.subr.mxu0 0.0
    %85 = vmatpush2.msra.mxu0 0.0
    %86 = vmatprep.subr.mxu0 0.0
    %87 = vmatpush2.msra.mxu0 0.0
    %88 = vmatprep.subr.mxu0 0.0
    %89 = vmatpush2.msra.mxu0 0.0
    %90 = vmatprep.subr.mxu0 0.0
    %91 = vmatpush2.msra.mxu0 0.0
    %92 = vmatprep.subr.mxu0 0.0
    %93 = vmatpush2.msra.mxu0 0.0
    %94 = vmatprep.subr.mxu0 0.0
    %95 = vmatpush2.msra.mxu0 0.0
    %96 = vmatprep.subr.mxu0 0.0
    %97 = vmatpush2.msra.mxu0 0.0
    %98 = vmatprep.subr.mxu0 0.0
    %99 = vmatpush2.msra.mxu0 0.0
    %100 = vmatprep.subr.mxu0 0.0
    %101 = vmatpush2.msra.mxu0 0.0
    %102 = vmatprep.subr.mxu0 0.0
    %103 = vmatpush2.msra.mxu0 0.0
    %104 = vmatprep.subr.mxu0 0.0
    %105 = vmatpush2.msra.mxu0 0.0
    %106 = vmatprep.subr.mxu0 0.0
    %107 = vmatpush2.msra.mxu0 0.0
    %108 = vmatprep.subr.mxu0 0.0
    %109 = vmatpush2.msra.mxu0 0.0
    %110 = vmatprep.subr.mxu0 0.0
    %111 = vmatpush2.msra.mxu0 0.0
    %112 = vmatprep.subr.mxu0 0.0
    %113 = vmatpush2.msra.mxu0 0.0
    %114 = vmatprep.mubr.f32.mxu0 0.0
    %115 = vmatmul.mubr.f32.gmra.mxu0 %v48
    %v116 = vpop.f32.mrf.mxu0
    %v117 = vadd.f32 0.0, %v116
    %v118 = vpop.f32.mrf.mxu0
    %119 = vdwg.mxu0
    %v120 = vld [vmem:[%s2] sm:$0x1]
    %v122 = vlaneseq
    %v123 = vshrl.u32 %v122, 7
    %v124 = vsub.s32 0, %v123
    %v125 = vrot.slane %v120, %v124
    %v127 = vadd.f32 %v117, %v125
    %vm128 = vcmask 130048
    %129 = vst.msk [vmem:[#allocation7] sm:$0xff] %vm128, %v127
    // Predicated region
    $region22: #{dynamics_net_forward.1} parent=1 // pred_check
      _
    $region23: #{dynamics_net_forward.1} parent=1 // pred_check_branch
      %131 = sbr.rel (0) target = $region25
    $region24: #{dynamics_net_forward.1} parent=1 // pred_region
      %s133 = ssub.s32 128, 128
      %134 = vsyncadd [#allocation4], %s133
      %s136 = sshll.u32 [#allocation7], 4
      %s137 = int_to_ptr.vmem [resolvable:$true] %s136
      %139 = dma.vmem_to_hbm [thread:$0]  %s137, 128, %s3, [#allocation4]
    $region25: #{dynamics_net_forward.1} parent=1 // pred_fallthru
      _
    // Predicated region
    $region26: #{dynamics_net_forward.1} parent=1 // pred_check
      _
    $region27: #{dynamics_net_forward.1} parent=1 // pred_check_branch
      %141 = sbr.rel (0) target = $region29
    $region28: #{dynamics_net_forward.1} parent=1 // pred_region
      %142 = dma.done [#allocation4], 128
    $region29: #{dynamics_net_forward.1} parent=1 // pred_fallthru
      _
    %143 = vsyncpa [#allocation3], 1
    %144 = vsyncpa [#allocation6], 1
    %145 = vsyncpa [#allocation4], 1

</llo_original>
